<compile_context>
chip_gen: v5e
topology: v5e:2x2
jax: 0.10.0
libtpu: 0.0.40
codegen_flags: <defaults>
</compile_context>

<pallas_src>
import functools

import jax
import jax.numpy as jnp
from jax.experimental import pallas as pl
from jax.experimental.pallas import tpu as pltpu

BN_EPS = 1e-5

# head (fused 1x1) column widths: branch1, branch2 stage0, branch3 stage0, branch4
_C1, _C2A, _C3A, _C4 = 96, 48, 64, 64            # sum = 272
# final output row widths: branch1, branch2, branch3, branch4
_O1, _O2, _O3, _O4 = 96, 64, 96, 64              # sum = 320


def _vmem():
    return pl.BlockSpec(memory_space=pltpu.MemorySpace.VMEM)


# ---------------------------------------------------------------------------
# pltpu.roll direction probe (makes the static tap shifts robust to the
# hardware rotate convention; one trivial kernel, cached).
# ---------------------------------------------------------------------------
@functools.lru_cache(maxsize=None)
def _roll_sign():
    """Return s such that pltpu.roll(x, (s*off) % L, axis=1)[:, l] == x[:, l+off]."""
    def k(x_ref, o_ref):
        o_ref[...] = pltpu.roll(x_ref[...], 1, axis=1)

    x = jax.lax.broadcasted_iota(jnp.float32, (8, 128), 1)
    y = pl.pallas_call(
        k, out_shape=jax.ShapeDtypeStruct((8, 128), jnp.float32),
        in_specs=[_vmem()], out_specs=_vmem())(x)
    return -1 if bool(jnp.all(y == jnp.roll(x, 1, axis=1))) else 1


# ---------------------------------------------------------------------------
# host-side (trace-time) parameter folding and conv-tap constants
# ---------------------------------------------------------------------------
def _fold_conv_bn(p, k):
    """(Cout,Cin,K,K) conv + eval BN -> w_t (Cout, K*K*Cin) with BN scale folded
    (column order = tap-major, channel-minor) and bias (Cout, 1)."""
    scale = p["gamma"] * jax.lax.rsqrt(p["var"] + BN_EPS)
    bias = p["beta"] - p["mean"] * scale
    cout, cin = p["w"].shape[0], p["w"].shape[1]
    w_t = jnp.transpose(p["w"], (0, 2, 3, 1)).reshape(cout, k * k * cin)
    return w_t * scale[:, None], bias.reshape(cout, 1)


def _tap_offsets(k, pad, w):
    """Static flattened-position offset of each tap of a 'same' KxK conv."""
    return [(i - pad) * w + (j - pad) for i in range(k) for j in range(k)]


def _tap_masks(k, pad, n, h, w):
    """(k*k, n*h*w) validity mask: 1 where the tap's source pixel is inside the
    image (zero-padding / cross-image roll wrap-around gets masked off)."""
    hh = jnp.arange(h)
    ww = jnp.arange(w)
    rows = []
    for i in range(k):
        for j in range(k):
            di, dj = i - pad, j - pad
            mh = ((hh + di) >= 0) & ((hh + di) < h)
            mw = ((ww + dj) >= 0) & ((ww + dj) < w)
            m = (mh[:, None] & mw[None, :]).astype(jnp.float32).reshape(h * w)
            rows.append(jnp.tile(m, (n,)))
    return jnp.stack(rows, axis=0)


def _inv_pool_count(n, h, w):
    """1 / (#valid neighbours) for 3x3/s1/p1 avg-pool, count_include_pad=False."""
    hh = jnp.arange(h)
    ww = jnp.arange(w)
    ch = jnp.minimum(hh + 1, h - 1) - jnp.maximum(hh - 1, 0) + 1
    cw = jnp.minimum(ww + 1, w - 1) - jnp.maximum(ww - 1, 0) + 1
    cnt = (ch[:, None] * cw[None, :]).astype(jnp.float32).reshape(h * w)
    return jnp.tile(1.0 / cnt, (n,)).reshape(1, n * h * w)


# ---------------------------------------------------------------------------
# fused Pallas kernel + jitted wrapper
# ---------------------------------------------------------------------------
@functools.lru_cache(maxsize=None)
def _build_forward(n, h, w, roll_sign):
    hw = h * w
    L = n * hw
    offs5 = _tap_offsets(5, 2, w)
    offs3 = _tap_offsets(3, 1, w)
    shifts5 = [(roll_sign * o) % L for o in offs5]
    shifts3 = [(roll_sign * o) % L for o in offs3]
    center5 = offs5.index(0)          # tap whose mask is all-ones
    center3 = offs3.index(0)

    def _conv(act_f32, w_ref, b_ref, m_ref, shifts, center):
        """act (Cin, L) f32 -> relu(conv * bn_scale + bn_bias) (Cout, L) f32.
        Single im2col matmul; bf16 taps built with lane roll + boundary mask."""
        act16 = act_f32.astype(jnp.bfloat16)            # one cast per conv input
        slabs = []
        for t, s in enumerate(shifts):
            slab = act16 if s == 0 else pltpu.roll(act16, s, axis=1)
            if t != center:                              # centre mask is all-ones
                slab = slab * m_ref[t:t + 1, :]
            slabs.append(slab)
        patches = jnp.concatenate(slabs, axis=0)         # (K*K*Cin, L) bf16
        y = jnp.dot(w_ref[...], patches, preferred_element_type=jnp.float32)
        return jnp.maximum(y + b_ref[...], 0.0)

    def kernel(x_ref, wh_ref, bh_ref, w2_ref, b2_ref, w3b_ref, b3b_ref,
               w3c_ref, b3c_ref, m5_ref, m3_ref, inv_ref, o_ref):
        # fused branch heads: one matmul reading x once (272 output rows)
        head = jnp.dot(wh_ref[...], x_ref[...],
                       preferred_element_type=jnp.float32) + bh_ref[...]
        c0, c1 = 0, _C1
        c2, c3, c4 = c1 + _C2A, c1 + _C2A + _C3A, c1 + _C2A + _C3A + _C4
        b1 = jnp.maximum(head[c0:c1, :], 0.0)        # branch1 output   (96, L)
        a2 = jnp.maximum(head[c1:c2, :], 0.0)        # branch2 stage-0  (48, L)
        a3 = jnp.maximum(head[c2:c3, :], 0.0)        # branch3 stage-0  (64, L)
        h4 = head[c3:c4, :]                          # branch4 1x1, pre-pool (64, L)

        b2 = _conv(a2, w2_ref, b2_ref, m5_ref, shifts5, center5)   # (64, L)
        t3 = _conv(a3, w3b_ref, b3b_ref, m3_ref, shifts3, center3) # (96, L)
        b3 = _conv(t3, w3c_ref, b3c_ref, m3_ref, shifts3, center3) # (96, L)

        # branch4: 3x3/s1/p1 avg-pool (count_include_pad=False) commuted after
        # its 1x1 conv; the BN bias was folded into h4 (pool of a constant is
        # the constant), so only sum-of-valid-taps * 1/count + ReLU remain.
        m3f = m3_ref[...].astype(jnp.float32)        # one convert, (9, L)
        pooled = h4                                  # centre tap: shift 0, mask 1
        for t, s in enumerate(shifts3):
            if t == center3:
                continue
            shifted = h4 if s == 0 else pltpu.roll(h4, s, axis=1)
            pooled = pooled + shifted * m3f[t:t + 1, :]
        b4 = jnp.maximum(pooled * inv_ref[...], 0.0)                # (64, L)

        # lane-dense (320, L) output slab, PyTorch branch-concat order
        o_ref[0:_O1, :] = b1
        o_ref[_O1:_O1 + _O2, :] = b2
        o_ref[_O1 + _O2:_O1 + _O2 + _O3, :] = b3
        o_ref[_O1 + _O2 + _O3:_O1 + _O2 + _O3 + _O4, :] = b4

    @jax.jit
    def fwd(x_nchw, params):
        # NCHW -> (C, N*H*W): channels on sublanes, positions on lanes.
        xt = jnp.transpose(x_nchw, (1, 0, 2, 3)).reshape(192, L)
        xt = xt.astype(jnp.bfloat16)

        w1, c1 = _fold_conv_bn(params["b1_0"], 1)
        w2a, c2a = _fold_conv_bn(params["b2_0"], 1)
        w2b, c2b = _fold_conv_bn(params["b2_1"], 5)
        w3a, c3a = _fold_conv_bn(params["b3_0"], 1)
        w3b, c3b = _fold_conv_bn(params["b3_1"], 3)
        w3c, c3c = _fold_conv_bn(params["b3_2"], 3)
        w4, c4 = _fold_conv_bn(params["b4_0"], 1)

        w_head = jnp.concatenate([w1, w2a, w3a, w4], axis=0).astype(jnp.bfloat16)
        b_head = jnp.concatenate([c1, c2a, c3a, c4], axis=0)      # (272, 1) f32

        m5 = _tap_masks(5, 2, n, h, w).astype(jnp.bfloat16)       # exact 0/1
        m3 = _tap_masks(3, 1, n, h, w).astype(jnp.bfloat16)
        inv = _inv_pool_count(n, h, w)

        out_t = pl.pallas_call(
            kernel,
            out_shape=jax.ShapeDtypeStruct((_O1 + _O2 + _O3 + _O4, L),
                                           jnp.float32),
            in_specs=[_vmem()] * 12,
            out_specs=_vmem(),
        )(xt, w_head, b_head,
          w2b.astype(jnp.bfloat16), c2b,
          w3b.astype(jnp.bfloat16), c3b,
          w3c.astype(jnp.bfloat16), c3c,
          m5, m3, inv)

        return jnp.transpose(out_t.reshape(320, n, h, w), (1, 0, 2, 3))

    return fwd


def incept_block_5b(x_nchw, params):
    n, c, h, w = x_nchw.shape
    assert c == 192, "InceptBlock5b expects 192 input channels"
    return _build_forward(n, h, w, _roll_sign())(x_nchw, params)


# ---------------------------------------------------------------------------
# Parameter init (deterministic, synthetic)
# ---------------------------------------------------------------------------
def init_conv_bn(key, cin, cout, k):
    k1, k2, k3, k4, k5 = jax.random.split(key, 5)
    w = jax.random.normal(k1, (cout, cin, k, k), jnp.float32) / jnp.sqrt(
        float(cin * k * k))
    gamma = 1.0 + 0.1 * jax.random.normal(k2, (cout,), jnp.float32)
    beta = 0.1 * jax.random.normal(k3, (cout,), jnp.float32)
    mean = 0.1 * jax.random.normal(k4, (cout,), jnp.float32)
    var = jnp.abs(jax.random.normal(k5, (cout,), jnp.float32)) + 0.5
    return dict(w=w, gamma=gamma, beta=beta, mean=mean, var=var)


def init_params(key):
    ks = jax.random.split(key, 8)
    return {
        "b1_0": init_conv_bn(ks[0], 192, 96, 1),
        "b2_0": init_conv_bn(ks[1], 192, 48, 1),
        "b2_1": init_conv_bn(ks[2], 48, 64, 5),
        "b3_0": init_conv_bn(ks[3], 192, 64, 1),
        "b3_1": init_conv_bn(ks[4], 64, 96, 3),
        "b3_2": init_conv_bn(ks[5], 96, 96, 3),
        "b4_0": init_conv_bn(ks[6], 192, 64, 1),
    }


# ---------------------------------------------------------------------------
# Pure-JAX f32 reference (correctness check)
# ---------------------------------------------------------------------------
def _ref_conv_bn_relu(x_nhwc, p, pad):
    w = jnp.transpose(p["w"], (2, 3, 1, 0))                       # HWIO
    y = jax.lax.conv_general_dilated(
        x_nhwc, w, (1, 1), [(pad, pad), (pad, pad)],
        dimension_numbers=("NHWC", "HWIO", "NHWC"),
        precision=jax.lax.Precision.HIGHEST)
    scale = p["gamma"] / jnp.sqrt(p["var"] + BN_EPS)
    bias = p["beta"] - p["mean"] * scale
    return jnp.maximum(y * scale + bias, 0.0)


def _ref_avgpool(x_nhwc):
    win, strd = (1, 3, 3, 1), (1, 1, 1, 1)
    pads = [(0, 0), (1, 1), (1, 1), (0, 0)]
    s = jax.lax.reduce_window(x_nhwc, 0.0, jax.lax.add, win, strd, pads)
    c = jax.lax.reduce_window(jnp.ones_like(x_nhwc[..., :1]), 0.0, jax.lax.add,
                              win, strd, pads)
    return s / c


def _reference(x_nchw, params):
    x = jnp.transpose(x_nchw, (0, 2, 3, 1))
    b1 = _ref_conv_bn_relu(x, params["b1_0"], 0)
    b2 = _ref_conv_bn_relu(x, params["b2_0"], 0)
    b2 = _ref_conv_bn_relu(b2, params["b2_1"], 2)
    b3 = _ref_conv_bn_relu(x, params["b3_0"], 0)
    b3 = _ref_conv_bn_relu(b3, params["b3_1"], 1)
    b3 = _ref_conv_bn_relu(b3, params["b3_2"], 1)
    b4 = _ref_conv_bn_relu(_ref_avgpool(x), params["b4_0"], 0)
    y = jnp.concatenate([b1, b2, b3, b4], axis=-1)
    return jnp.transpose(y, (0, 3, 1, 2))


if __name__ == "__main__":
    key = jax.random.PRNGKey(0)
    kx, kp = jax.random.split(key)
    # in_channels is fixed to 192 by the module; small batch / spatial dims.
    x = jax.random.normal(kx, (2, 192, 8, 8), jnp.float32)
    params = init_params(kp)

    out = jax.block_until_ready(incept_block_5b(x, params))
    assert out.shape == (2, 320, 8, 8), out.shape

    ref = jax.block_until_ready(_reference(x, params))
    err_max = float(jnp.max(jnp.abs(out - ref)))
    err_rel = float(jnp.linalg.norm(out - ref) / jnp.linalg.norm(ref))
    # bf16 matmul inputs with f32 MXU accumulation: per-element error is a few
    # ulps of bf16 on O(1) activations; a structural bug would exceed both
    # bounds by orders of magnitude.
    assert err_max < 1e-1, f"max abs err too large: {err_max}"
    assert err_rel < 1.5e-2, f"relative L2 err too large: {err_rel}"
    print("KERNEL_OK")
</pallas_src>

<mosaic_0001>
module attributes {stable_mosaic.version = 11 : i64} {
  func.func @k(%arg0: memref<8x128xf32, #tpu.memory_space<vmem>>, %arg1: memref<8x128xf32, #tpu.memory_space<vmem>>) attributes {dimension_semantics = [], scalar_prefetch = 0 : i64, scratch_operands = 0 : i64, tpu.core_type = #tpu.core_type<tc>} {
    %c0 = arith.constant 0 : index
    %c0_0 = arith.constant 0 : index
    %0 = vector.load %arg0[%c0, %c0_0] : memref<8x128xf32, #tpu.memory_space<vmem>>, vector<8x128xf32>
    %c1_i32 = arith.constant 1 : i32
    %1 = tpu.dynamic_rotate %0 by %c1_i32 dim 1 : vector<8x128xf32>, i32 -> vector<8x128xf32>
    %c0_1 = arith.constant 0 : index
    %c0_2 = arith.constant 0 : index
    %2 = vector.load %arg1[%c0_1, %c0_2] : memref<8x128xf32, #tpu.memory_space<vmem>>, vector<8x128xf32>
    tpu.vector_store %arg1[%c0_1, %c0_2], %1 {strides = array<i32>} : memref<8x128xf32, #tpu.memory_space<vmem>>, vector<8x128xf32>,
    return
  }
}

</mosaic_0001>

<llo_original>
// kernel: tpu_custom_call.1
$region0: #{tpu_custom_call.1}
  #allocation0 [shape = 'u32[]', space=smem, size = 0x4, offset = 0x4, fixed_abs, tag = 'smem constant byte address 0x4 - core index']
  #allocation1 [shape = 'u32[72,128]{1,0:T(1,128)}', space=vmem, size = 0x9000, scoped, tag = 'internal scratch']
  %s0 = inlined_call_operand.hbm [shape: f32[8,128], index: 0, kind: input, shape index: {}]
  %s1 = inlined_call_operand.hbm [shape: f32[8,128], index: 1, kind: output, shape index: {}]
  %s2 = sld [smem:[#allocation0]]
  $region18: #{tpu_custom_call.1} parent=0
    _
  %s4 = ssub.s32 1, %s2
  %s5 = scalar_select 0, %s4, %s2
  $region1: #{tpu_custom_call.1} parent=0
    #allocation2 [shape = 'u8[4096]{0}', space=vmem, size = 0x1000, scoped, tag = 'input window, operand 0, single buffered']
    #allocation3 [shape = 's32[1]{0}', space=sflag, size = 0x4, scoped, tag = 'scoped memory for tpu_custom_call.1']
    #allocation4 [shape = 's32[1]{0}', space=sflag, size = 0x4, scoped, tag = 'scoped memory for tpu_custom_call.1']
    #allocation5 [shape = 'u8[4096]{0}', space=vmem, size = 0x1000, scoped, tag = 'output window, operand 0, single buffered']
    %6 = vsyncpa [#allocation3], 0
    %7 = vsyncpa [#allocation4], 0
    // Predicated region
    $region2: #{tpu_custom_call.1} parent=1 // pred_check
      _
    $region3: #{tpu_custom_call.1} parent=1 // pred_check_branch
      %9 = sbr.rel (0) target = $region5
    $region4: #{tpu_custom_call.1} parent=1 // pred_region
      %11 = vsyncadd [#allocation3], 0
      %s13 = sshll.u32 %s0, 4
      %s14 = int_to_ptr.hbm [resolvable:$true] %s13
      %s15 = sshll.u32 [#allocation2], 4
      %s16 = int_to_ptr.vmem [resolvable:$true] %s15
      %18 = dma.hbm_to_vmem [thread:$0]  %s14, 128, %s16, [#allocation3]
    $region5: #{tpu_custom_call.1} parent=1 // pred_fallthru
      _
    // Predicated region
    $region6: #{tpu_custom_call.1} parent=1 // pred_check
      _
    $region7: #{tpu_custom_call.1} parent=1 // pred_check_branch
      %20 = sbr.rel (0) target = $region9
    $region8: #{tpu_custom_call.1} parent=1 // pred_region
      %22 = dma.done [#allocation3], 128
    $region9: #{tpu_custom_call.1} parent=1 // pred_fallthru
      _
    %v23 = vld [vmem:[#allocation2] sm:$0xff]
    %24 = vrot.lane.b32.xlu0 %v23, 1
    %v25 = vpop.permute.xlu0 %24
    %26 = vst [vmem:[#allocation5] sm:$0xff] %v25
    // Predicated region
    $region10: #{tpu_custom_call.1} parent=1 // pred_check
      _
    $region11: #{tpu_custom_call.1} parent=1 // pred_check_branch
      %28 = sbr.rel (0) target = $region13
    $region12: #{tpu_custom_call.1} parent=1 // pred_region
      %30 = vsyncadd [#allocation4], 0
      %s32 = sshll.u32 [#allocation5], 4
      %s33 = int_to_ptr.vmem [resolvable:$true] %s32
      %s34 = sshll.u32 %s1, 4
      %s35 = int_to_ptr.hbm [resolvable:$true] %s34
      %37 = dma.vmem_to_hbm [thread:$0]  %s33, 128, %s35, [#allocation4]
    $region13: #{tpu_custom_call.1} parent=1 // pred_fallthru
      _
    // Predicated region
    $region14: #{tpu_custom_call.1} parent=1 // pred_check
      _
    $region15: #{tpu_custom_call.1} parent=1 // pred_check_branch
      %39 = sbr.rel (0) target = $region17
    $region16: #{tpu_custom_call.1} parent=1 // pred_region
      %41 = dma.done [#allocation4], 128
    $region17: #{tpu_custom_call.1} parent=1 // pred_fallthru
      _
    %42 = vsyncpa [#allocation3], 1
    %43 = vsyncpa [#allocation4], 1

</llo_original>
